<compile_context>
chip_gen: v5e
topology: v5e:2x2
jax: 0.10.0
libtpu: 0.0.40
codegen_flags: <defaults>
</compile_context>

<pallas_src>
import functools
import math

import jax
import jax.numpy as jnp
from jax.experimental import pallas as pl
from jax.experimental.pallas import tpu as pltpu


def make_pe_table(max_len: int, d_model: int, dtype=jnp.float32) -> jnp.ndarray:
    """Builds the (max_len, d_model) sinusoidal positional-encoding buffer."""
    position = jnp.arange(0, max_len, dtype=jnp.float32)[:, None]          # (L, 1)
    div_term = jnp.exp(
        jnp.arange(0, d_model, 2, dtype=jnp.float32)
        * -(math.log(10000.0) / d_model)
    )                                                                       # (D/2,)
    angles = position * div_term                                            # (L, D/2)
    pe = jnp.zeros((max_len, d_model), dtype=jnp.float32)
    pe = pe.at[:, 0::2].set(jnp.sin(angles))
    pe = pe.at[:, 1::2].set(jnp.cos(angles))
    return pe.astype(dtype)


def _lane_dense_view(S: int, D: int):
    """Factor the per-batch (S, D) slab into (R, C) with C a multiple of 128.

    If no clean lane-dense factoring exists, keep (S, D): stores are only
    lane-masked (never the 1-sublane (1, L) slab of the previous version).
    """
    if D % 128 == 0:
        return S, D
    L = S * D
    if L % 128 == 0:
        best_c = 128
        c = 256
        while c <= min(L, 4096):
            if L % c == 0:
                best_c = c
            c *= 2
        return L // best_c, best_c
    return S, D


def _choose_row_tile(R: int, C: int, itemsize: int, target_bytes: int = 2 << 20):
    """Row tile of ~target_bytes; ragged last block handled by the grid."""
    max_rows = max(8, target_bytes // max(1, C * itemsize))
    if R <= max_rows:
        return R                      # full dim: always a legal block shape
    return max(8, (max_rows // 8) * 8)  # multiple of 8 sublanes


def _pe_kernel(seed_ref, x_ref, pe_ref, o_ref, *,
               dropout_prob, apply_dropout, rows_per_batch, tile_rows, cols):
    # x_ref / pe_ref / o_ref are 2-D (TR, C) VMEM tiles (batch dim squeezed).
    y = x_ref[...] + pe_ref[...]

    if apply_dropout:
        r = pl.program_id(0)
        b = pl.program_id(1)
        # Global element index (unique across the whole (B, R, C) array).
        row_in = jax.lax.broadcasted_iota(jnp.int32, y.shape, 0).astype(jnp.uint32)
        col_in = jax.lax.broadcasted_iota(jnp.int32, y.shape, 1).astype(jnp.uint32)
        g_row = (b * rows_per_batch + r * tile_rows).astype(jnp.uint32) + row_in
        idx = g_row * jnp.uint32(cols) + col_in

        # Stateless counter-based hash (lowbias32-style) keyed by the seed.
        key = (seed_ref[0].astype(jnp.uint32) * jnp.uint32(0x9E3779B9)
               + jnp.uint32(0x85EBCA6B))
        h = idx ^ key
        h = (h ^ (h >> 16)) * jnp.uint32(0x7FEB352D)
        h = (h ^ (h >> 15)) * jnp.uint32(0x846CA68B)
        h = h ^ (h >> 16)

        # keep iff top-24 bits >= p * 2**24  ->  P(keep) = 1 - p.
        bits24 = (h >> 8).astype(jnp.int32)          # uniform in [0, 2**24)
        thresh = min(int(round(dropout_prob * float(1 << 24))), (1 << 24) - 1)
        keep = bits24 >= jnp.int32(thresh)

        # Scale in f32, cast once at the store (no bf16 bias on 1/(1-p)).
        scale = jnp.float32(1.0 / (1.0 - dropout_prob))
        y = jnp.where(keep, y.astype(jnp.float32) * scale, jnp.float32(0.0))

    o_ref[...] = y if y.dtype == o_ref.dtype else y.astype(o_ref.dtype)


def positional_encoding(
    x: jnp.ndarray,
    pe_table: jnp.ndarray,
    *,
    dropout_prob: float = 0.0,
    training: bool = False,
    seed: int = 0,
) -> jnp.ndarray:
    """out = dropout(x + pe[:S]) computed with a Pallas TPU kernel."""
    B, S, D = x.shape
    apply_dropout = bool(training) and float(dropout_prob) > 0.0

    # PE added in the input dtype (mem-bound op).  Build the table in the
    # working dtype (make_pe_table(dtype=...)) to avoid this cast per call.
    pe_slice = pe_table[:S, :]
    if pe_slice.dtype != x.dtype:
        pe_slice = pe_slice.astype(x.dtype)

    R, C = _lane_dense_view(S, D)
    TR = _choose_row_tile(R, C, x.dtype.itemsize)
    n_row_tiles = pl.cdiv(R, TR)

    x_view = x.reshape(B, R, C)            # free row-major re-view (glue)
    pe_view = pe_slice.reshape(R, C)
    seed_arr = jnp.array([seed], dtype=jnp.int32)

    kernel = functools.partial(
        _pe_kernel,
        dropout_prob=float(dropout_prob),
        apply_dropout=apply_dropout,
        rows_per_batch=R,
        tile_rows=TR,
        cols=C,
    )

    # Grid: (row_tiles, batch) with batch innermost.  The PE block index is
    # constant across consecutive (batch) steps, so its DMA is skipped and PE
    # is fetched once per row tile instead of once per (b, r).
    out = pl.pallas_call(
        kernel,
        out_shape=jax.ShapeDtypeStruct((B, R, C), x.dtype),
        grid_spec=pltpu.PrefetchScalarGridSpec(
            num_scalar_prefetch=1,                 # seed lives in SMEM
            grid=(n_row_tiles, B),
            in_specs=[
                # x: one (TR, C) tile per grid step, batch dim squeezed.
                pl.BlockSpec((None, TR, C), lambda r, b, seed: (b, r, 0)),
                # pe: matching (TR, C) tile, invariant over the batch axis.
                pl.BlockSpec((TR, C), lambda r, b, seed: (r, 0)),
            ],
            out_specs=pl.BlockSpec(
                (None, TR, C), lambda r, b, seed: (b, r, 0)
            ),
        ),
        compiler_params=pltpu.CompilerParams(
            dimension_semantics=("parallel", "parallel"),
        ),
    )(seed_arr, x_view, pe_view)

    return out.reshape(B, S, D)


if __name__ == "__main__":
    # Small shapes consistent with the module's forward: (batch, seq, d_model)
    B, S, D = 2, 8, 32
    max_len = 64
    dropout_prob = 0.1

    key = jax.random.PRNGKey(0)
    x = jax.random.normal(key, (B, S, D), dtype=jnp.float32)
    pe_table = make_pe_table(max_len, D)

    ref = x + pe_table[:S, :][None, :, :]

    # Eval-mode forward (dropout identity, matching nn.Dropout.eval()) -- exact.
    out_eval = jax.block_until_ready(
        positional_encoding(x, pe_table, dropout_prob=dropout_prob, training=False)
    )
    assert out_eval.shape == x.shape and out_eval.dtype == x.dtype
    assert jnp.allclose(out_eval, ref, atol=1e-6, rtol=1e-6)

    # Training-mode forward (inverted dropout via an in-kernel stateless hash).
    out_train = jax.block_until_ready(
        positional_encoding(
            x, pe_table, dropout_prob=dropout_prob, training=True, seed=1234
        )
    )
    kept = out_train != 0
    n_drop = int(jnp.sum(~kept))
    scaled_ref = ref * (1.0 / (1.0 - dropout_prob))
    # Kept elements must equal ref / (1 - p); some (but not all) are dropped.
    assert jnp.allclose(
        jnp.where(kept, out_train, 0.0),
        jnp.where(kept, scaled_ref, 0.0),
        atol=1e-5, rtol=1e-5,
    )
    assert 0 < n_drop < x.size
    # TODO(synk): dropout mask is a stateless counter-based hash RNG --
    # statistically equivalent to torch's nn.Dropout but not bitwise-identical
    # to its RNG stream.

    print("KERNEL_OK")
</pallas_src>

<mosaic_0001>
module attributes {stable_mosaic.version = 11 : i64} {
  func.func @_pe_kernel(%arg0: i32, %arg1: i32, %arg2: memref<1xi32, #tpu.memory_space<smem>>, %arg3: memref<1x1x256xf32, #tpu.memory_space<vmem>>, %arg4: memref<1x256xf32, #tpu.memory_space<vmem>>, %arg5: memref<1x1x256xf32, #tpu.memory_space<vmem>>) attributes {dimension_semantics = [#tpu.dimension_semantics<parallel>, #tpu.dimension_semantics<parallel>], iteration_bounds = array<i64: 1, 2>, scalar_prefetch = 1 : i64, scratch_operands = 0 : i64, tpu.core_type = #tpu.core_type<tc>, window_params = [{transform_indices = @transform_0, window_bounds = array<i64: 1, 1, 256>}, {transform_indices = @transform_1, window_bounds = array<i64: 1, 256>}, {transform_indices = @transform_2, window_bounds = array<i64: 1, 1, 256>}]} {
    %c0 = arith.constant 0 : index
    %c0_0 = arith.constant 0 : index
    %c0_1 = arith.constant 0 : index
    %0 = vector.load %arg3[%c0, %c0_0, %c0_1] : memref<1x1x256xf32, #tpu.memory_space<vmem>>, vector<1x1x256xf32>
    %1 = vector.shape_cast %0 : vector<1x1x256xf32> to vector<1x256xf32>
    %c0_2 = arith.constant 0 : index
    %c0_3 = arith.constant 0 : index
    %2 = vector.load %arg4[%c0_2, %c0_3] : memref<1x256xf32, #tpu.memory_space<vmem>>, vector<1x256xf32>
    %3 = arith.addf %1, %2 : vector<1x256xf32>
    %c0_4 = arith.constant 0 : index
    %c0_5 = arith.constant 0 : index
    %c0_6 = arith.constant 0 : index
    %4 = vector.load %arg5[%c0_4, %c0_5, %c0_6] : memref<1x1x256xf32, #tpu.memory_space<vmem>>, vector<1x1x256xf32>
    %5 = vector.shape_cast %4 : vector<1x1x256xf32> to vector<1x256xf32>
    %6 = vector.shape_cast %3 : vector<1x256xf32> to vector<1x1x256xf32>
    tpu.vector_store %arg5[%c0_4, %c0_5, %c0_6], %6 {strides = array<i32>} : memref<1x1x256xf32, #tpu.memory_space<vmem>>, vector<1x1x256xf32>,
    return
  }
  func.func @transform_0(%arg0: i32, %arg1: i32, %arg2: memref<1xi32, #tpu.memory_space<smem>>) -> (i32, i32, i32) {
    %c0_i32 = arith.constant 0 : i32
    %c0_i32_0 = arith.constant 0 : i32
    return %arg1, %arg0, %c0_i32 : i32, i32, i32
  }
  func.func @transform_1(%arg0: i32, %arg1: i32, %arg2: memref<1xi32, #tpu.memory_space<smem>>) -> (i32, i32) {
    %c0_i32 = arith.constant 0 : i32
    %c0_i32_0 = arith.constant 0 : i32
    return %arg0, %c0_i32 : i32, i32
  }
  func.func @transform_2(%arg0: i32, %arg1: i32, %arg2: memref<1xi32, #tpu.memory_space<smem>>) -> (i32, i32, i32) {
    %c0_i32 = arith.constant 0 : i32
    %c0_i32_0 = arith.constant 0 : i32
    return %arg1, %arg0, %c0_i32 : i32, i32, i32
  }
}

</mosaic_0001>

<llo_original>
// kernel: tpu_custom_call.1
$region0: #{tpu_custom_call.1}
  #allocation0 [shape = 'u32[]', space=smem, size = 0x4, offset = 0x4, fixed_abs, tag = 'smem constant byte address 0x4 - core index']
  #allocation1 [shape = 'u32[72,128]{1,0:T(1,128)}', space=vmem, size = 0x9000, scoped, tag = 'internal scratch']
  #allocation2 [shape = 's32[1]{0}', space=sflag, size = 0x4, scoped, tag = 'scoped memory for tpu_custom_call.1']
  #allocation3 [shape = 's32[1]{0:T(128)S(6)}', space=smem, size = 0x200, scoped, tag = 'prefetched SMEM operand 0']
  %s0 = inlined_call_operand.<no memory space> [shape: s32[1], index: 0, kind: input, shape index: {}]
  %s1 = inlined_call_operand.hbm [shape: f32[2,1,256], index: 1, kind: input, shape index: {}]
  %s2 = inlined_call_operand.vmem [shape: f32[1,256], index: 2, kind: input, shape index: {}]
  %s3 = inlined_call_operand.hbm [shape: f32[2,1,256], index: 3, kind: output, shape index: {}]
  %s4 = sld [smem:[#allocation0]]
  $region45: #{tpu_custom_call.1} parent=0
    _
  %s6 = ssub.s32 1, %s4
  %s7 = scalar_select 0, %s6, %s4
  %8 = sst [smem:[#allocation3]] %s0
  $region1: #{tpu_custom_call.1} parent=0
    #allocation4 [shape = 'u8[2048]{0}', space=vmem, size = 0x800, scoped, tag = 'input window, operand 1']
    #allocation5 [shape = 's32[2]{0}', space=sflag, size = 0x8, scoped, tag = 'scoped memory for tpu_custom_call.1']
    #allocation6 [shape = 's32[2]{0}', space=sflag, size = 0x8, scoped, tag = 'scoped memory for tpu_custom_call.1']
    #allocation7 [shape = 'u8[2048]{0}', space=vmem, size = 0x800, scoped, tag = 'output window, operand 0']
    %9 = vsyncpa [#allocation5], 0
    %s10 = scalar_lea.sflag [#allocation5], 1
    %11 = vsyncpa %s10, 0
    %12 = vsyncpa [#allocation6], 0
    %s13 = scalar_lea.sflag [#allocation6], 1
    %14 = vsyncpa %s13, 0
    loop: start=0, step=1, limit=4
    $region2: #{tpu_custom_call.1} parent=1 // loop_pre_header
      _
    $region3: #{tpu_custom_call.1} parent=1 // loop_header
      %s16 = sphi 0, %s20
      %p17 = scmp.ge.s32.totalorder %s16, 4
      %s23 = sphi 0, %s35
      %s24 = sphi 0, %s31
      %s25 = sphi 0, %s23
      %s26 = sphi 0, %s24
      %s27 = sphi 0, %s25
      %s28 = sphi 0, %s26
      %s40 = sphi 0, %s42
      %s43 = sphi 0, %s40
      %s44 = sphi 0, %s43
      %s60 = sphi 0, %s44
      %s66 = sphi 0, %s68
      %s69 = sphi 0, %s66
      %s70 = sphi 0, %s69
      %s86 = sphi 0, %s70
      %s94 = sphi 0, %s96
      %s97 = sphi 0, %s94
      %s98 = sphi 0, %s97
      %s114 = sphi 0, %s98
    $region4: #{tpu_custom_call.1} parent=1 // loop_header_branch
      %19 = sbr.rel (%p17) target = $region8
    $region5: #{tpu_custom_call.1} parent=1 // loop_body
      %s21 = ssub.s32 %s16, 1
      %s22 = ssub.s32 %s16, 2
      %s29 = sadd.s32 1, %s24
      %p30 = scmp.ge.s32.totalorder %s29, 2
      %s31 = scalar_select %p30, 0, %s29
      %s32 = sadd.s32 1, %s23
      %s33 = scalar_select %p30, %s32, %s23
      %p34 = scmp.ge.s32.totalorder %s33, 1
      %s35 = scalar_select %p34, 0, %s33
      %s36 = ssub.s32 %s24, %s31
      %s37 = ssub.s32 %s23, %s35
      %s38 = sor.u32 %s36, %s37
      %p39 = scmp.eq.s32.totalorder %s38, 0
      %s41 = sadd.s32 %s40, 1
      %s42 = scalar_select %p39, %s40, %s41
      %p45 = pneg %p39
      %p46 = scmp.eq.s32.totalorder %s16, 1
      %p47 = por %p45, %p46
      %p48 = scmp.ne.s32.totalorder %s40, %s43
      %p49 = scmp.eq.s32.totalorder %s16, 0
      %p50 = por %p48, %p49
      %p51 = scmp.ne.s32.totalorder %s40, %s43
      %p52 = scmp.eq.s32.totalorder %s21, 1
      %p53 = por %p51, %p52
      %p54 = scmp.ne.s32.totalorder %s43, %s44
      %p55 = scmp.eq.s32.totalorder %s21, 0
      %p56 = por %p54, %p55
      %p57 = scmp.ne.s32.totalorder %s43, %s44
      %p58 = scmp.eq.s32.totalorder %s22, 1
      %p59 = por %p57, %p58
      %p61 = scmp.ne.s32.totalorder %s44, %s60
      %p62 = scmp.eq.s32.totalorder %s22, 0
      %p63 = por %p61, %p62
      %s64 = ssub.s32 %s23, %s35
      %p65 = scmp.eq.s32.totalorder %s64, 0
      %s67 = sadd.s32 %s66, 1
      %s68 = scalar_select %p65, %s66, %s67
      %p71 = pneg %p65
      %p72 = scmp.eq.s32.totalorder %s16, 1
      %p73 = por %p71, %p72
      %p74 = scmp.ne.s32.totalorder %s66, %s69
      %p75 = scmp.eq.s32.totalorder %s16, 0
      %p76 = por %p74, %p75
      %p77 = scmp.ne.s32.totalorder %s66, %s69
      %p78 = scmp.eq.s32.totalorder %s21, 1
      %p79 = por %p77, %p78
      %p80 = scmp.ne.s32.totalorder %s69, %s70
      %p81 = scmp.eq.s32.totalorder %s21, 0
      %p82 = por %p80, %p81
      %p83 = scmp.ne.s32.totalorder %s69, %s70
      %p84 = scmp.eq.s32.totalorder %s22, 1
      %p85 = por %p83, %p84
      %p87 = scmp.ne.s32.totalorder %s70, %s86
      %p88 = scmp.eq.s32.totalorder %s22, 0
      %p89 = por %p87, %p88
      %s90 = ssub.s32 %s24, %s31
      %s91 = ssub.s32 %s23, %s35
      %s92 = sor.u32 %s90, %s91
      %p93 = scmp.eq.s32.totalorder %s92, 0
      %s95 = sadd.s32 %s94, 1
      %s96 = scalar_select %p93, %s94, %s95
      %p99 = pneg %p93
      %p100 = scmp.eq.s32.totalorder %s16, 1
      %p101 = por %p99, %p100
      %p102 = scmp.ne.s32.totalorder %s94, %s97
      %p103 = scmp.eq.s32.totalorder %s16, 0
      %p104 = por %p102, %p103
      %p105 = scmp.ne.s32.totalorder %s94, %s97
      %p106 = scmp.eq.s32.totalorder %s21, 1
      %p107 = por %p105, %p106
      %p108 = scmp.ne.s32.totalorder %s97, %s98
      %p109 = scmp.eq.s32.totalorder %s21, 0
      %p110 = por %p108, %p109
      %p111 = scmp.ne.s32.totalorder %s97, %s98
      %p112 = scmp.eq.s32.totalorder %s22, 1
      %p113 = por %p111, %p112
      %p115 = scmp.ne.s32.totalorder %s98, %s114
      %p116 = scmp.eq.s32.totalorder %s22, 0
      %p117 = por %p115, %p116
      %p118 = scmp.le.s32.totalorder 1, %s16
      %p119 = scmp.lt.s32.totalorder %s16, 3
      %p120 = pnand %p118, %p119
      %p121 = pneg %p120
      // Predicated region
      $region9: #{tpu_custom_call.1} parent=5 // pred_check
        _
      $region10: #{tpu_custom_call.1} parent=5 // pred_check_branch
        %123 = sbr.rel (%p120) target = $region12
      $region11: #{tpu_custom_call.1} parent=5 // pred_region
        %s124 = ssub.s32 %s16, 1
        // Predicated region
        $region13: #{tpu_custom_call.1} parent=11 // pred_check
          %p125 = pneg %p82
        $region14: #{tpu_custom_call.1} parent=11 // pred_check_branch
          %127 = sbr.rel (%p125) target = $region16
        $region15: #{tpu_custom_call.1} parent=11 // pred_region
          %p128 = scmp.lt.s32.totalorder %s25, 0
          %s129 = scalar_select %p128, %s25, 0
          %s130 = smul.addr %s129, 2
          %s131 = scalar_lea.vmem %s2, %s130
        $region16: #{tpu_custom_call.1} parent=11 // pred_fallthru
          _
      $region12: #{tpu_custom_call.1} parent=5 // pred_fallthru
        _
      %p132 = scmp.lt.s32.totalorder %s16, 2
      // Predicated region
      $region17: #{tpu_custom_call.1} parent=5 // pred_check
        %p133 = pneg %p132
      $region18: #{tpu_custom_call.1} parent=5 // pred_check_branch
        %135 = sbr.rel (%p133) target = $region20
      $region19: #{tpu_custom_call.1} parent=5 // pred_region
        // Predicated region
        $region21: #{tpu_custom_call.1} parent=19 // pred_check
          %p136 = pneg %p50
        $region22: #{tpu_custom_call.1} parent=19 // pred_check_branch
          %138 = sbr.rel (%p136) target = $region24
        $region23: #{tpu_custom_call.1} parent=19 // pred_region
          %s139 = sand.u32 %s40, 1
          %s140 = scalar_lea.sflag [#allocation5], %s139
          %s141 = sand.u32 %s40, 1
          %s142 = smul.addr %s141, 2
          %s143 = scalar_lea.vmem [#allocation4], %s142
          %145 = vsyncadd %s140, 0
          %s146 = smul.addr %s23, 2
          %s147 = smul.addr %s24, 2
          %s148 = sadd.s32 %s146, %s147
          %s149 = scalar_lea.hbm %s1, %s148
          %s151 = sshll.u32 %s149, 4
          %s152 = int_to_ptr.hbm [resolvable:$true] %s151
          %s153 = sshll.u32 %s143, 4
          %s154 = int_to_ptr.vmem [resolvable:$true] %s153
          %156 = dma.hbm_to_vmem [thread:$0]  %s152, 32, %s154, %s140
        $region24: #{tpu_custom_call.1} parent=19 // pred_fallthru
          _
      $region20: #{tpu_custom_call.1} parent=5 // pred_fallthru
        _
      %p157 = scmp.le.s32.totalorder 1, %s16
      %p158 = scmp.lt.s32.totalorder %s16, 3
      %p159 = pnand %p157, %p158
      %p160 = pneg %p159
      // Predicated region
      $region25: #{tpu_custom_call.1} parent=5 // pred_check
        _
      $region26: #{tpu_custom_call.1} parent=5 // pred_check_branch
        %162 = sbr.rel (%p159) target = $region28
      $region27: #{tpu_custom_call.1} parent=5 // pred_region
        %s163 = ssub.s32 %s16, 1
        %s164 = sand.u32 %s43, 1
        %s165 = scalar_lea.sflag [#allocation5], %s164
        %s166 = sand.u32 %s43, 1
        %s167 = smul.addr %s166, 2
        %s168 = scalar_lea.vmem [#allocation4], %s167
        // Predicated region
        $region29: #{tpu_custom_call.1} parent=27 // pred_check
          %p169 = pneg %p56
        $region30: #{tpu_custom_call.1} parent=27 // pred_check_branch
          %171 = sbr.rel (%p169) target = $region32
        $region31: #{tpu_custom_call.1} parent=27 // pred_region
          %173 = dma.done %s165, 32
        $region32: #{tpu_custom_call.1} parent=27 // pred_fallthru
          _
        %s174 = sand.u32 %s43, 1
        %s175 = scalar_lea.sflag [#allocation5], %s174
        %s176 = sand.u32 %s43, 1
        %s177 = smul.addr %s176, 2
        %s178 = scalar_lea.vmem [#allocation4], %s177
        %p179 = pneg %p56
        %p180 = pneg %p53
        %p181 = scmp.lt.s32.totalorder %s25, 0
        %s182 = scalar_select %p181, %s25, 0
        %s183 = smul.addr %s182, 2
        %s184 = scalar_lea.vmem %s2, %s183
        %p185 = pneg %p82
        %p186 = pneg %p79
        %p187 = pneg %p110
        %p188 = pneg %p107
        %s189 = sand.u32 %s97, 1
        %s190 = scalar_lea.sflag [#allocation6], %s189
        %s191 = sand.u32 %s97, 1
        %s192 = smul.addr %s191, 2
        %s193 = scalar_lea.vmem [#allocation7], %s192
        %p194 = scmp.lt.s32.totalorder %s25, 0
        %s195 = scalar_select %p194, %s25, 0
        %s196 = smul.addr %s195, 2
        %s197 = scalar_lea.vmem %s2, %s196
        %v198 = vld [vmem:[%s168] sm:$0x3]
        %v199 = vld [vmem:[%s197] sm:$0x3]
        %v200 = vadd.f32 %v198, %v199
        %v201 = vlaneseq
        %vm202 = vcmp.ge.s32.totalorder %v201, 0
        %vm203 = vcmp.lt.s32.totalorder %v201, 256
        %vm204 = vmand %vm202, %vm203
        %205 = vst.msk [vmem:[%s193] sm:$0x3] %vm204, %v200
        %s206 = sand.u32 %s97, 1
        %s207 = scalar_lea.sflag [#allocation6], %s206
        %s208 = sand.u32 %s97, 1
        %s209 = smul.addr %s208, 2
        %s210 = scalar_lea.vmem [#allocation7], %s209
        // Predicated region
        $region33: #{tpu_custom_call.1} parent=27 // pred_check
          %p211 = pneg %p107
        $region34: #{tpu_custom_call.1} parent=27 // pred_check_branch
          %213 = sbr.rel (%p211) target = $region36
        $region35: #{tpu_custom_call.1} parent=27 // pred_region
          %215 = vsyncadd %s207, 0
          %s216 = smul.addr %s25, 2
          %s217 = smul.addr %s26, 2
          %s218 = sadd.s32 %s216, %s217
          %s219 = scalar_lea.hbm %s3, %s218
          %s221 = sshll.u32 %s210, 4
          %s222 = int_to_ptr.vmem [resolvable:$true] %s221
          %s223 = sshll.u32 %s219, 4
          %s224 = int_to_ptr.hbm [resolvable:$true] %s223
          %226 = dma.vmem_to_hbm [thread:$0]  %s222, 32, %s224, %s207
        $region36: #{tpu_custom_call.1} parent=27 // pred_fallthru
          _
      $region28: #{tpu_custom_call.1} parent=5 // pred_fallthru
        _
      %p227 = scmp.le.s32.totalorder 2, %s16
      // Predicated region
      $region37: #{tpu_custom_call.1} parent=5 // pred_check
        %p228 = pneg %p227
      $region38: #{tpu_custom_call.1} parent=5 // pred_check_branch
        %230 = sbr.rel (%p228) target = $region40
      $region39: #{tpu_custom_call.1} parent=5 // pred_region
        %s231 = ssub.s32 %s16, 2
        // Predicated region
        $region41: #{tpu_custom_call.1} parent=39 // pred_check
          %p232 = pneg %p113
        $region42: #{tpu_custom_call.1} parent=39 // pred_check_branch
          %234 = sbr.rel (%p232) target = $region44
        $region43: #{tpu_custom_call.1} parent=39 // pred_region
          %s235 = sand.u32 %s98, 1
          %s236 = scalar_lea.sflag [#allocation6], %s235
          %s237 = sand.u32 %s98, 1
          %s238 = smul.addr %s237, 2
          %s239 = scalar_lea.vmem [#allocation7], %s238
          %241 = dma.done %s236, 32
        $region44: #{tpu_custom_call.1} parent=39 // pred_fallthru
          _
      $region40: #{tpu_custom_call.1} parent=5 // pred_fallthru
        _
    $region6: #{tpu_custom_call.1} parent=1 // loop_footer
      %s20 = sadd.s32 1, %s16
    $region7: #{tpu_custom_call.1} parent=1 // loop_footer_branch
      %15 = sbr.rel target = $region3
    $region8: #{tpu_custom_call.1} parent=1 // loop_exit
      _
    %242 = vsyncpa [#allocation5], 1
    %s243 = scalar_lea.sflag [#allocation5], 1
    %244 = vsyncpa %s243, 1
    %245 = vsyncpa [#allocation6], 1
    %s246 = scalar_lea.sflag [#allocation6], 1
    %247 = vsyncpa %s246, 1

</llo_original>
